<compile_context>
chip_gen: v5e
topology: v5e:2x2
jax: 0.10.0
libtpu: 0.0.40
codegen_flags: <defaults>
</compile_context>

<pallas_src>
import functools

import jax
import jax.numpy as jnp
from jax.experimental import pallas as pl
from jax.experimental.pallas import tpu as pltpu


def _round_up(v, m):
    return ((v + m - 1) // m) * m


def _cdiv(a, b):
    return (a + b - 1) // b


# ----------------------------------------------------------------------------
# Fused MLP kernel: all Linear layers (+ ReLU on hidden layers) in one body.
# Grid tiles over rows; weights/biases are whole-array VMEM blocks reused at
# every grid step (constant index_map -> DMA'd once).
# ----------------------------------------------------------------------------
def _make_mlp_kernel(num_layers):
    def kernel(*refs):
        # refs = [x, w0, b0, w1, b1, ..., w_last, b_last, out]
        x_ref = refs[0]
        param_refs = refs[1:1 + 2 * num_layers]
        out_ref = refs[-1]

        h = x_ref[...]                          # (tm, z_dim), bf16 or f32
        for i in range(num_layers):
            w = param_refs[2 * i][...]          # (in_i, out_i), bf16 or f32
            b = param_refs[2 * i + 1][...]      # (1, out_i), f32
            acc = jnp.dot(h.astype(w.dtype), w,
                          preferred_element_type=jnp.float32) + b
            h = jnp.maximum(acc, 0.0) if i < num_layers - 1 else acc
        out_ref[...] = h.astype(out_ref.dtype)  # (tm, 2*z_dim) store

    return kernel


@functools.partial(jax.jit, static_argnames=("z_dim", "tile_m", "use_bf16"))
def dkf_latent_state_transition_forward(z, params, *, z_dim, tile_m=2048,
                                        use_bf16=True):
    """Forward pass of DKF_LatentStateTransition.

    Args:
      z: (seq_len, batch, z_dim) float32.
      params: list of (W, b) with W shape (in, out), b shape (1, out), float32.
      z_dim: latent dimension.
      tile_m: target row tile (rounded to the sublane granularity; capped so
        there are >= 2 grid steps when the row count permits).
      use_bf16: feed bf16 operands (input tile + weights) to the MXU with f32
        accumulation / bias / ReLU. Valid and beneficial on v5e, v6e and v7x.

    Returns:
      (mean, logvar), each (seq_len, batch, z_dim) float32.
    """
    seq_len, batch, in_dim = z.shape
    assert in_dim == z_dim, "input last dim must equal z_dim"
    n = seq_len * batch
    out_dim = 2 * z_dim
    num_layers = len(params)

    op_dtype = jnp.bfloat16 if use_bf16 else jnp.float32
    item = 2 if use_bf16 else 4

    # Cast inside this jit so in a real model the cast fuses with z's producer.
    x = z.reshape(n, z_dim).astype(op_dtype)
    ws = [w.astype(op_dtype) for (w, _) in params]
    bs = [b.astype(jnp.float32) for (_, b) in params]

    # ---- row tiling ----------------------------------------------------------
    g = 16 if use_bf16 else 8                   # sublane granularity per dtype
    n_al = _round_up(n, g)
    tm = min(_round_up(tile_m, g), n_al)
    # Megacore (v7x has 2 TCs): guarantee >= 2 grid steps when rows permit so
    # the "parallel" axis can be sharded across both cores / DMA engines.
    if n_al >= 2 * g:
        tm = min(tm, _round_up(_cdiv(n_al, 2), g))
    grid_m = _cdiv(n, tm)                       # boundary block masked if ragged

    # ---- specs ---------------------------------------------------------------
    in_specs = [pl.BlockSpec((tm, z_dim), lambda i: (i, 0))]
    flat_params = []
    for w, b in zip(ws, bs):
        in_specs.append(pl.BlockSpec(w.shape, lambda i: (0, 0)))
        in_specs.append(pl.BlockSpec(b.shape, lambda i: (0, 0)))
        flat_params += [w, b]

    out_specs = pl.BlockSpec((tm, out_dim), lambda i: (i, 0))
    out_shape = jax.ShapeDtypeStruct((n, out_dim), jnp.float32)

    # ---- advisory cost estimate ----------------------------------------------
    flops = 2 * n * sum(int(w.shape[0]) * int(w.shape[1]) for w in ws)
    bytes_accessed = (
        n * z_dim * item
        + sum(int(w.shape[0]) * int(w.shape[1]) * item for w in ws)
        + sum(int(b.shape[1]) * 4 for b in bs)
        + n * out_dim * 4)
    cost = pl.CostEstimate(flops=flops, transcendentals=0,
                           bytes_accessed=int(bytes_accessed))

    # ---- VMEM limit from actual per-step footprint (headroom, v7x-safe cap) --
    max_width = max([z_dim] + [int(w.shape[1]) for w in ws])
    param_bytes = (sum(int(w.shape[0]) * int(w.shape[1]) * item for w in ws)
                   + sum(int(b.shape[1]) * 4 for b in bs))
    step_bytes = (2 * tm * z_dim * item         # double-buffered input tile
                  + 2 * tm * out_dim * 4        # double-buffered output tile
                  + 2 * param_bytes             # weights/biases (+2nd buffer)
                  + 4 * tm * max_width * 4)     # activation staging headroom
    vmem_limit = int(min(max(2 * step_bytes, 16 * 1024 * 1024),
                         48 * 1024 * 1024))

    kernel = _make_mlp_kernel(num_layers)
    out = pl.pallas_call(
        kernel,
        grid_spec=pltpu.PrefetchScalarGridSpec(
            num_scalar_prefetch=0,
            grid=(grid_m,),
            in_specs=in_specs,
            out_specs=out_specs,
        ),
        out_shape=out_shape,
        compiler_params=pltpu.CompilerParams(
            dimension_semantics=("parallel",),
            vmem_limit_bytes=vmem_limit,
        ),
        cost_estimate=cost,
    )(x, *flat_params)

    # mean / logvar split fuses with the consumer inside this jit.
    mean = out[:, :z_dim].reshape(seq_len, batch, z_dim)
    logvar = out[:, z_dim:].reshape(seq_len, batch, z_dim)
    return mean, logvar


# ----------------------------------------------------------------------------
# Deterministic parameter init (mimics nn.Linear's U(-1/sqrt(fan_in), +...))
# ----------------------------------------------------------------------------
def init_params(key, z_dim, layers_dim):
    params = []
    dims = [z_dim] + list(layers_dim) + [z_dim * 2]
    for i in range(len(dims) - 1):
        fan_in, fan_out = dims[i], dims[i + 1]
        key, kw, kb = jax.random.split(key, 3)
        bound = 1.0 / float(fan_in) ** 0.5
        w = jax.random.uniform(kw, (fan_in, fan_out), jnp.float32, -bound, bound)
        b = jax.random.uniform(kb, (1, fan_out), jnp.float32, -bound, bound)
        params.append((w, b))
    return params


def reference_forward(z, params, z_dim):
    """Pure-JAX full-precision reference of DKF_LatentStateTransition.forward."""
    hi = jax.lax.Precision.HIGHEST
    h = z
    for (w, b) in params[:-1]:
        h = jnp.maximum(jnp.dot(h, w, precision=hi) + b, 0.0)   # Linear + ReLU
    w, b = params[-1]
    h = jnp.dot(h, w, precision=hi) + b                          # final Linear
    return h[..., :z_dim], h[..., z_dim:]


if __name__ == "__main__":
    # Small shapes consistent with the module:
    #   z: (seq_len=8, batch=2, z_dim=16); hidden layers [64, 64].
    seq_len, batch = 8, 2
    z_dim = 16
    layers_dim = [64, 64]

    key = jax.random.PRNGKey(0)
    key, kz = jax.random.split(key)
    z = jax.random.normal(kz, (seq_len, batch, z_dim), jnp.float32)
    params = init_params(key, z_dim, layers_dim)

    mean_ref, logvar_ref = reference_forward(z, params, z_dim)

    # f32 operand path: tight check against the full-precision reference.
    mean32, logvar32 = dkf_latent_state_transition_forward(
        z, params, z_dim=z_dim, use_bf16=False)
    mean32, logvar32 = jax.block_until_ready((mean32, logvar32))
    assert mean32.shape == (seq_len, batch, z_dim)
    assert logvar32.shape == (seq_len, batch, z_dim)
    assert jnp.allclose(mean32, mean_ref, atol=1e-4, rtol=1e-4), "mean mismatch (f32)"
    assert jnp.allclose(logvar32, logvar_ref, atol=1e-4, rtol=1e-4), "logvar mismatch (f32)"

    # bf16 operand path (default fast path on all generations; f32 accumulate).
    # Note: activations are rounded to bf16 between layers -> loose tolerance.
    mean16, logvar16 = dkf_latent_state_transition_forward(
        z, params, z_dim=z_dim, use_bf16=True)
    mean16, logvar16 = jax.block_until_ready((mean16, logvar16))
    assert mean16.shape == (seq_len, batch, z_dim)
    assert logvar16.shape == (seq_len, batch, z_dim)
    assert jnp.allclose(mean16, mean_ref, atol=5e-2, rtol=5e-2), "mean mismatch (bf16)"
    assert jnp.allclose(logvar16, logvar_ref, atol=5e-2, rtol=5e-2), "logvar mismatch (bf16)"

    print("KERNEL_OK")
</pallas_src>

<mosaic_0001>
module attributes {stable_mosaic.version = 11 : i64} {
  func.func @kernel(%arg0: i32, %arg1: memref<8x16xf32, #tpu.memory_space<vmem>>, %arg2: memref<16x64xf32, #tpu.memory_space<vmem>>, %arg3: memref<1x64xf32, #tpu.memory_space<vmem>>, %arg4: memref<64x64xf32, #tpu.memory_space<vmem>>, %arg5: memref<1x64xf32, #tpu.memory_space<vmem>>, %arg6: memref<64x32xf32, #tpu.memory_space<vmem>>, %arg7: memref<1x32xf32, #tpu.memory_space<vmem>>, %arg8: memref<8x32xf32, #tpu.memory_space<vmem>>) attributes {dimension_semantics = [#tpu.dimension_semantics<parallel>], iteration_bounds = array<i64: 2>, scalar_prefetch = 0 : i64, scratch_operands = 0 : i64, tpu.core_type = #tpu.core_type<tc>, window_params = [{transform_indices = @transform_0, window_bounds = array<i64: 8, 16>}, {pipeline_mode = #tpu.pipeline_mode<synchronous>, transform_indices = @transform_1, window_bounds = array<i64: 16, 64>}, {pipeline_mode = #tpu.pipeline_mode<synchronous>, transform_indices = @transform_2, window_bounds = array<i64: 1, 64>}, {pipeline_mode = #tpu.pipeline_mode<synchronous>, transform_indices = @transform_3, window_bounds = array<i64: 64, 64>}, {pipeline_mode = #tpu.pipeline_mode<synchronous>, transform_indices = @transform_4, window_bounds = array<i64: 1, 64>}, {pipeline_mode = #tpu.pipeline_mode<synchronous>, transform_indices = @transform_5, window_bounds = array<i64: 64, 32>}, {pipeline_mode = #tpu.pipeline_mode<synchronous>, transform_indices = @transform_6, window_bounds = array<i64: 1, 32>}, {transform_indices = @transform_7, window_bounds = array<i64: 8, 32>}]} {
    %c0 = arith.constant 0 : index
    %c0_0 = arith.constant 0 : index
    %0 = vector.load %arg1[%c0, %c0_0] : memref<8x16xf32, #tpu.memory_space<vmem>>, vector<8x16xf32>
    %c0_1 = arith.constant 0 : index
    %c0_2 = arith.constant 0 : index
    %1 = vector.load %arg2[%c0_1, %c0_2] : memref<16x64xf32, #tpu.memory_space<vmem>>, vector<16x64xf32>
    %c0_3 = arith.constant 0 : index
    %c0_4 = arith.constant 0 : index
    %2 = vector.load %arg3[%c0_3, %c0_4] : memref<1x64xf32, #tpu.memory_space<vmem>>, vector<1x64xf32>
    %cst = arith.constant dense<0.000000e+00> : vector<8x64xf32>
    %3 = tpu.matmul %0, %1, %cst {dimension_numbers = #tpu.dot_dimension_numbers<[1], [0], [0], [1], [0, 0, 1, 1], [], []>} : vector<8x16xf32>, vector<16x64xf32>, vector<8x64xf32> -> vector<8x64xf32>
    %4 = vector.broadcast %2 : vector<1x64xf32> to vector<8x64xf32>
    %5 = arith.addf %3, %4 : vector<8x64xf32>
    %cst_5 = arith.constant 0.000000e+00 : f32
    %6 = vector.broadcast %cst_5 : f32 to vector<8x64xf32>
    %7 = arith.maximumf %5, %6 : vector<8x64xf32>
    %c0_6 = arith.constant 0 : index
    %c0_7 = arith.constant 0 : index
    %8 = vector.load %arg4[%c0_6, %c0_7] : memref<64x64xf32, #tpu.memory_space<vmem>>, vector<64x64xf32>
    %c0_8 = arith.constant 0 : index
    %c0_9 = arith.constant 0 : index
    %9 = vector.load %arg5[%c0_8, %c0_9] : memref<1x64xf32, #tpu.memory_space<vmem>>, vector<1x64xf32>
    %cst_10 = arith.constant dense<0.000000e+00> : vector<8x64xf32>
    %10 = tpu.matmul %7, %8, %cst_10 {dimension_numbers = #tpu.dot_dimension_numbers<[1], [0], [0], [1], [0, 0, 1, 1], [], []>} : vector<8x64xf32>, vector<64x64xf32>, vector<8x64xf32> -> vector<8x64xf32>
    %11 = vector.broadcast %9 : vector<1x64xf32> to vector<8x64xf32>
    %12 = arith.addf %10, %11 : vector<8x64xf32>
    %cst_11 = arith.constant 0.000000e+00 : f32
    %13 = vector.broadcast %cst_11 : f32 to vector<8x64xf32>
    %14 = arith.maximumf %12, %13 : vector<8x64xf32>
    %c0_12 = arith.constant 0 : index
    %c0_13 = arith.constant 0 : index
    %15 = vector.load %arg6[%c0_12, %c0_13] : memref<64x32xf32, #tpu.memory_space<vmem>>, vector<64x32xf32>
    %c0_14 = arith.constant 0 : index
    %c0_15 = arith.constant 0 : index
    %16 = vector.load %arg7[%c0_14, %c0_15] : memref<1x32xf32, #tpu.memory_space<vmem>>, vector<1x32xf32>
    %cst_16 = arith.constant dense<0.000000e+00> : vector<8x32xf32>
    %17 = tpu.matmul %14, %15, %cst_16 {dimension_numbers = #tpu.dot_dimension_numbers<[1], [0], [0], [1], [0, 0, 1, 1], [], []>} : vector<8x64xf32>, vector<64x32xf32>, vector<8x32xf32> -> vector<8x32xf32>
    %18 = vector.broadcast %16 : vector<1x32xf32> to vector<8x32xf32>
    %19 = arith.addf %17, %18 : vector<8x32xf32>
    %c0_17 = arith.constant 0 : index
    %c0_18 = arith.constant 0 : index
    %20 = vector.load %arg8[%c0_17, %c0_18] : memref<8x32xf32, #tpu.memory_space<vmem>>, vector<8x32xf32>
    tpu.vector_store %arg8[%c0_17, %c0_18], %19 {strides = array<i32>} : memref<8x32xf32, #tpu.memory_space<vmem>>, vector<8x32xf32>,
    return
  }
  func.func @transform_0(%arg0: i32) -> (i32, i32) {
    %c0_i32 = arith.constant 0 : i32
    %c0_i32_0 = arith.constant 0 : i32
    return %arg0, %c0_i32 : i32, i32
  }
  func.func @transform_1(%arg0: i32) -> (i32, i32) {
    %c0_i32 = arith.constant 0 : i32
    %c0_i32_0 = arith.constant 0 : i32
    %c0_i32_1 = arith.constant 0 : i32
    return %c0_i32, %c0_i32_0 : i32, i32
  }
  func.func @transform_2(%arg0: i32) -> (i32, i32) {
    %c0_i32 = arith.constant 0 : i32
    %c0_i32_0 = arith.constant 0 : i32
    %c0_i32_1 = arith.constant 0 : i32
    return %c0_i32, %c0_i32_0 : i32, i32
  }
  func.func @transform_3(%arg0: i32) -> (i32, i32) {
    %c0_i32 = arith.constant 0 : i32
    %c0_i32_0 = arith.constant 0 : i32
    %c0_i32_1 = arith.constant 0 : i32
    return %c0_i32, %c0_i32_0 : i32, i32
  }
  func.func @transform_4(%arg0: i32) -> (i32, i32) {
    %c0_i32 = arith.constant 0 : i32
    %c0_i32_0 = arith.constant 0 : i32
    %c0_i32_1 = arith.constant 0 : i32
    return %c0_i32, %c0_i32_0 : i32, i32
  }
  func.func @transform_5(%arg0: i32) -> (i32, i32) {
    %c0_i32 = arith.constant 0 : i32
    %c0_i32_0 = arith.constant 0 : i32
    %c0_i32_1 = arith.constant 0 : i32
    return %c0_i32, %c0_i32_0 : i32, i32
  }
  func.func @transform_6(%arg0: i32) -> (i32, i32) {
    %c0_i32 = arith.constant 0 : i32
    %c0_i32_0 = arith.constant 0 : i32
    %c0_i32_1 = arith.constant 0 : i32
    return %c0_i32, %c0_i32_0 : i32, i32
  }
  func.func @transform_7(%arg0: i32) -> (i32, i32) {
    %c0_i32 = arith.constant 0 : i32
    %c0_i32_0 = arith.constant 0 : i32
    return %arg0, %c0_i32 : i32, i32
  }
}

</mosaic_0001>

<llo_original>
// kernel: dkf_latent_state_transition_forward.1
$region0: #{dkf_latent_state_transition_forward.1}
  #allocation0 [shape = 'u32[]', space=smem, size = 0x4, offset = 0x4, fixed_abs, tag = 'smem constant byte address 0x4 - core index']
  #allocation1 [shape = 'u32[72,128]{1,0:T(1,128)}', space=vmem, size = 0x9000, scoped, tag = 'internal scratch']
  %s0 = inlined_call_operand.vmem [shape: f32[16,16], index: 0, kind: input, shape index: {}]
  %s1 = inlined_call_operand.vmem [shape: f32[16,64], index: 1, kind: input, shape index: {}]
  %s2 = inlined_call_operand.vmem [shape: f32[1,64], index: 2, kind: input, shape index: {}]
  %s3 = inlined_call_operand.vmem [shape: f32[64,64], index: 3, kind: input, shape index: {}]
  %s4 = inlined_call_operand.vmem [shape: f32[1,64], index: 4, kind: input, shape index: {}]
  %s5 = inlined_call_operand.vmem [shape: f32[64,32], index: 5, kind: input, shape index: {}]
  %s6 = inlined_call_operand.vmem [shape: f32[1,32], index: 6, kind: input, shape index: {}]
  %s7 = inlined_call_operand.vmem [shape: f32[16,32], index: 7, kind: output, shape index: {}]
  %s8 = sld [smem:[#allocation0]]
  $region61: #{dkf_latent_state_transition_forward.1} parent=0
    _
  %s10 = ssub.s32 1, %s8
  %s11 = scalar_select 0, %s10, %s8
  loop: start=0, step=1, limit=4
  $region2: #{dkf_latent_state_transition_forward.1} parent=0 // loop_pre_header
    _
  $region3: #{dkf_latent_state_transition_forward.1} parent=0 // loop_header
    %s13 = sphi 0, %s17
    %p14 = scmp.ge.s32.totalorder %s13, 4
    %s23 = sphi 0, %s25
    %s26 = sphi 0, %s23
    %s27 = sphi 0, %s26
    %s43 = sphi 0, %s27
    %s47 = sphi 0, %s47
    %s49 = sphi 0, %s47
    %s50 = sphi 0, %s49
    %s64 = sphi 0, %s50
    %s68 = sphi 0, %s68
    %s70 = sphi 0, %s68
    %s71 = sphi 0, %s70
    %s85 = sphi 0, %s71
    %s89 = sphi 0, %s89
    %s91 = sphi 0, %s89
    %s92 = sphi 0, %s91
    %s106 = sphi 0, %s92
    %s110 = sphi 0, %s110
    %s112 = sphi 0, %s110
    %s113 = sphi 0, %s112
    %s127 = sphi 0, %s113
    %s131 = sphi 0, %s131
    %s133 = sphi 0, %s131
    %s134 = sphi 0, %s133
    %s148 = sphi 0, %s134
    %s152 = sphi 0, %s152
    %s154 = sphi 0, %s152
    %s155 = sphi 0, %s154
    %s169 = sphi 0, %s155
    %s175 = sphi 0, %s177
    %s178 = sphi 0, %s175
    %s179 = sphi 0, %s178
    %s195 = sphi 0, %s179
  $region4: #{dkf_latent_state_transition_forward.1} parent=0 // loop_header_branch
    %16 = sbr.rel (%p14) target = $region8
  $region5: #{dkf_latent_state_transition_forward.1} parent=0 // loop_body
    %s18 = ssub.s32 %s13, 1
    %s19 = ssub.s32 %s13, 2
    %s20 = sadd.s32 %s13, 1
    %s21 = ssub.s32 %s13, %s20
    %p22 = scmp.eq.s32.totalorder %s21, 0
    %s24 = sadd.s32 %s23, 1
    %s25 = scalar_select %p22, %s23, %s24
    %p28 = pneg %p22
    %p29 = scmp.eq.s32.totalorder %s13, 1
    %p30 = por %p28, %p29
    %p31 = scmp.ne.s32.totalorder %s23, %s26
    %p32 = scmp.eq.s32.totalorder %s13, 0
    %p33 = por %p31, %p32
    %p34 = scmp.ne.s32.totalorder %s23, %s26
    %p35 = scmp.eq.s32.totalorder %s18, 1
    %p36 = por %p34, %p35
    %p37 = scmp.ne.s32.totalorder %s26, %s27
    %p38 = scmp.eq.s32.totalorder %s18, 0
    %p39 = por %p37, %p38
    %p40 = scmp.ne.s32.totalorder %s26, %s27
    %p41 = scmp.eq.s32.totalorder %s19, 1
    %p42 = por %p40, %p41
    %p44 = scmp.ne.s32.totalorder %s27, %s43
    %p45 = scmp.eq.s32.totalorder %s19, 0
    %p46 = por %p44, %p45
    %s48 = sadd.s32 %s47, 1
    %p51 = scmp.eq.s32.totalorder %s13, 1
    %p52 = scmp.ne.s32.totalorder %s47, %s49
    %p53 = scmp.eq.s32.totalorder %s13, 0
    %p54 = por %p52, %p53
    %p55 = scmp.ne.s32.totalorder %s47, %s49
    %p56 = scmp.eq.s32.totalorder %s18, 1
    %p57 = por %p55, %p56
    %p58 = scmp.ne.s32.totalorder %s49, %s50
    %p59 = scmp.eq.s32.totalorder %s18, 0
    %p60 = por %p58, %p59
    %p61 = scmp.ne.s32.totalorder %s49, %s50
    %p62 = scmp.eq.s32.totalorder %s19, 1
    %p63 = por %p61, %p62
    %p65 = scmp.ne.s32.totalorder %s50, %s64
    %p66 = scmp.eq.s32.totalorder %s19, 0
    %p67 = por %p65, %p66
    %s69 = sadd.s32 %s68, 1
    %p72 = scmp.eq.s32.totalorder %s13, 1
    %p73 = scmp.ne.s32.totalorder %s68, %s70
    %p74 = scmp.eq.s32.totalorder %s13, 0
    %p75 = por %p73, %p74
    %p76 = scmp.ne.s32.totalorder %s68, %s70
    %p77 = scmp.eq.s32.totalorder %s18, 1
    %p78 = por %p76, %p77
    %p79 = scmp.ne.s32.totalorder %s70, %s71
    %p80 = scmp.eq.s32.totalorder %s18, 0
    %p81 = por %p79, %p80
    %p82 = scmp.ne.s32.totalorder %s70, %s71
    %p83 = scmp.eq.s32.totalorder %s19, 1
    %p84 = por %p82, %p83
    %p86 = scmp.ne.s32.totalorder %s71, %s85
    %p87 = scmp.eq.s32.totalorder %s19, 0
    %p88 = por %p86, %p87
    %s90 = sadd.s32 %s89, 1
    %p93 = scmp.eq.s32.totalorder %s13, 1
    %p94 = scmp.ne.s32.totalorder %s89, %s91
    %p95 = scmp.eq.s32.totalorder %s13, 0
    %p96 = por %p94, %p95
    %p97 = scmp.ne.s32.totalorder %s89, %s91
    %p98 = scmp.eq.s32.totalorder %s18, 1
    %p99 = por %p97, %p98
    %p100 = scmp.ne.s32.totalorder %s91, %s92
    %p101 = scmp.eq.s32.totalorder %s18, 0
    %p102 = por %p100, %p101
    %p103 = scmp.ne.s32.totalorder %s91, %s92
    %p104 = scmp.eq.s32.totalorder %s19, 1
    %p105 = por %p103, %p104
    %p107 = scmp.ne.s32.totalorder %s92, %s106
    %p108 = scmp.eq.s32.totalorder %s19, 0
    %p109 = por %p107, %p108
    %s111 = sadd.s32 %s110, 1
    %p114 = scmp.eq.s32.totalorder %s13, 1
    %p115 = scmp.ne.s32.totalorder %s110, %s112
    %p116 = scmp.eq.s32.totalorder %s13, 0
    %p117 = por %p115, %p116
    %p118 = scmp.ne.s32.totalorder %s110, %s112
    %p119 = scmp.eq.s32.totalorder %s18, 1
    %p120 = por %p118, %p119
    %p121 = scmp.ne.s32.totalorder %s112, %s113
    %p122 = scmp.eq.s32.totalorder %s18, 0
    %p123 = por %p121, %p122
    %p124 = scmp.ne.s32.totalorder %s112, %s113
    %p125 = scmp.eq.s32.totalorder %s19, 1
    %p126 = por %p124, %p125
    %p128 = scmp.ne.s32.totalorder %s113, %s127
    %p129 = scmp.eq.s32.totalorder %s19, 0
    %p130 = por %p128, %p129
    %s132 = sadd.s32 %s131, 1
    %p135 = scmp.eq.s32.totalorder %s13, 1
    %p136 = scmp.ne.s32.totalorder %s131, %s133
    %p137 = scmp.eq.s32.totalorder %s13, 0
    %p138 = por %p136, %p137
    %p139 = scmp.ne.s32.totalorder %s131, %s133
    %p140 = scmp.eq.s32.totalorder %s18, 1
    %p141 = por %p139, %p140
    %p142 = scmp.ne.s32.totalorder %s133, %s134
    %p143 = scmp.eq.s32.totalorder %s18, 0
    %p144 = por %p142, %p143
    %p145 = scmp.ne.s32.totalorder %s133, %s134
    %p146 = scmp.eq.s32.totalorder %s19, 1
    %p147 = por %p145, %p146
    %p149 = scmp.ne.s32.totalorder %s134, %s148
    %p150 = scmp.eq.s32.totalorder %s19, 0
    %p151 = por %p149, %p150
    %s153 = sadd.s32 %s152, 1
    %p156 = scmp.eq.s32.totalorder %s13, 1
    %p157 = scmp.ne.s32.totalorder %s152, %s154
    %p158 = scmp.eq.s32.totalorder %s13, 0
    %p159 = por %p157, %p158
    %p160 = scmp.ne.s32.totalorder %s152, %s154
    %p161 = scmp.eq.s32.totalorder %s18, 1
    %p162 = por %p160, %p161
    %p163 = scmp.ne.s32.totalorder %s154, %s155
    %p164 = scmp.eq.s32.totalorder %s18, 0
    %p165 = por %p163, %p164
    %p166 = scmp.ne.s32.totalorder %s154, %s155
    %p167 = scmp.eq.s32.totalorder %s19, 1
    %p168 = por %p166, %p167
    %p170 = scmp.ne.s32.totalorder %s155, %s169
    %p171 = scmp.eq.s32.totalorder %s19, 0
    %p172 = por %p170, %p171
    %s173 = ssub.s32 %s13, %s20
    %p174 = scmp.eq.s32.totalorder %s173, 0
    %s176 = sadd.s32 %s175, 1
    %s177 = scalar_select %p174, %s175, %s176
    %p180 = pneg %p174
    %p181 = scmp.eq.s32.totalorder %s13, 1
    %p182 = por %p180, %p181
    %p183 = scmp.ne.s32.totalorder %s175, %s178
    %p184 = scmp.eq.s32.totalorder %s13, 0
    %p185 = por %p183, %p184
    %p186 = scmp.ne.s32.totalorder %s175, %s178
    %p187 = scmp.eq.s32.totalorder %s18, 1
    %p188 = por %p186, %p187
    %p189 = scmp.ne.s32.totalorder %s178, %s179
    %p190 = scmp.eq.s32.totalorder %s18, 0
    %p191 = por %p189, %p190
    %p192 = scmp.ne.s32.totalorder %s178, %s179
    %p193 = scmp.eq.s32.totalorder %s19, 1
    %p194 = por %p192, %p193
    %p196 = scmp.ne.s32.totalorder %s179, %s195
    %p197 = scmp.eq.s32.totalorder %s19, 0
    %p198 = por %p196, %p197
    %p199 = scmp.le.s32.totalorder 1, %s13
    %p200 = scmp.lt.s32.totalorder %s13, 3
    %p201 = pnand %p199, %p200
    %p202 = pneg %p201
    // Predicated region
    $region9: #{dkf_latent_state_transition_forward.1} parent=5 // pred_check
      _
    $region10: #{dkf_latent_state_transition_forward.1} parent=5 // pred_check_branch
      %204 = sbr.rel (%p201) target = $region12
    $region11: #{dkf_latent_state_transition_forward.1} parent=5 // pred_region
      %s205 = ssub.s32 %s13, 1
      // Predicated region
      $region13: #{dkf_latent_state_transition_forward.1} parent=11 // pred_check
        %p206 = pneg %p60
      $region14: #{dkf_latent_state_transition_forward.1} parent=11 // pred_check_branch
        %208 = sbr.rel (%p206) target = $region16
      $region15: #{dkf_latent_state_transition_forward.1} parent=11 // pred_region
        _
      $region16: #{dkf_latent_state_transition_forward.1} parent=11 // pred_fallthru
        _
      // Predicated region
      $region17: #{dkf_latent_state_transition_forward.1} parent=11 // pred_check
        %p209 = pneg %p81
      $region18: #{dkf_latent_state_transition_forward.1} parent=11 // pred_check_branch
        %211 = sbr.rel (%p209) target = $region20
      $region19: #{dkf_latent_state_transition_forward.1} parent=11 // pred_region
        _
      $region20: #{dkf_latent_state_transition_forward.1} parent=11 // pred_fallthru
        _
      // Predicated region
      $region21: #{dkf_latent_state_transition_forward.1} parent=11 // pred_check
        %p212 = pneg %p102
      $region22: #{dkf_latent_state_transition_forward.1} parent=11 // pred_check_branch
        %214 = sbr.rel (%p212) target = $region24
      $region23: #{dkf_latent_state_transition_forward.1} parent=11 // pred_region
        _
      $region24: #{dkf_latent_state_transition_forward.1} parent=11 // pred_fallthru
        _
      // Predicated region
      $region25: #{dkf_latent_state_transition_forward.1} parent=11 // pred_check
        %p215 = pneg %p123
      $region26: #{dkf_latent_state_transition_forward.1} parent=11 // pred_check_branch
        %217 = sbr.rel (%p215) target = $region28
      $region27: #{dkf_latent_state_transition_forward.1} parent=11 // pred_region
        _
      $region28: #{dkf_latent_state_transition_forward.1} parent=11 // pred_fallthru
        _
      // Predicated region
      $region29: #{dkf_latent_state_transition_forward.1} parent=11 // pred_check
        %p218 = pneg %p144
      $region30: #{dkf_latent_state_transition_forward.1} parent=11 // pred_check_branch
        %220 = sbr.rel (%p218) target = $region32
      $region31: #{dkf_latent_state_transition_forward.1} parent=11 // pred_region
        _
      $region32: #{dkf_latent_state_transition_forward.1} parent=11 // pred_fallthru
        _
      // Predicated region
      $region33: #{dkf_latent_state_transition_forward.1} parent=11 // pred_check
        %p221 = pneg %p165
      $region34: #{dkf_latent_state_transition_forward.1} parent=11 // pred_check_branch
        %223 = sbr.rel (%p221) target = $region36
      $region35: #{dkf_latent_state_transition_forward.1} parent=11 // pred_region
        _
      $region36: #{dkf_latent_state_transition_forward.1} parent=11 // pred_fallthru
        _
    $region12: #{dkf_latent_state_transition_forward.1} parent=5 // pred_fallthru
      _
    %p224 = scmp.lt.s32.totalorder %s13, 2
    // Predicated region
    $region37: #{dkf_latent_state_transition_forward.1} parent=5 // pred_check
      %p225 = pneg %p224
    $region38: #{dkf_latent_state_transition_forward.1} parent=5 // pred_check_branch
      %227 = sbr.rel (%p225) target = $region40
    $region39: #{dkf_latent_state_transition_forward.1} parent=5 // pred_region
      // Predicated region
      $region41: #{dkf_latent_state_transition_forward.1} parent=39 // pred_check
        %p228 = pneg %p33
      $region42: #{dkf_latent_state_transition_forward.1} parent=39 // pred_check_branch
        %230 = sbr.rel (%p228) target = $region44
      $region43: #{dkf_latent_state_transition_forward.1} parent=39 // pred_region
        %p231 = scmp.lt.s32.totalorder %s13, 1
        %s232 = scalar_select %p231, %s13, 1
        %s233 = smul.addr %s232, 8
        %s234 = scalar_lea.vmem %s0, %s233
      $region44: #{dkf_latent_state_transition_forward.1} parent=39 // pred_fallthru
        _
    $region40: #{dkf_latent_state_transition_forward.1} parent=5 // pred_fallthru
      _
    %p235 = scmp.le.s32.totalorder 1, %s13
    %p236 = scmp.lt.s32.totalorder %s13, 3
    %p237 = pnand %p235, %p236
    %p238 = pneg %p237
    // Predicated region
    $region45: #{dkf_latent_state_transition_forward.1} parent=5 // pred_check
      _
    $region46: #{dkf_latent_state_transition_forward.1} parent=5 // pred_check_branch
      %240 = sbr.rel (%p237) target = $region48
    $region47: #{dkf_latent_state_transition_forward.1} parent=5 // pred_region
      %s241 = ssub.s32 %s13, 1
      %p242 = scmp.lt.s32.totalorder %s18, 1
      %s243 = scalar_select %p242, %s18, 1
      %s244 = smul.addr %s243, 8
      %s245 = scalar_lea.vmem %s0, %s244
      %p246 = pneg %p39
      %p247 = pneg %p36
      %p248 = pneg %p60
      %p249 = pneg %p57
      %p250 = pneg %p81
      %p251 = pneg %p78
      %p252 = pneg %p102
      %p253 = pneg %p99
      %p254 = pneg %p123
      %p255 = pneg %p120
      %p256 = pneg %p144
      %p257 = pneg %p141
      %p258 = pneg %p165
      %p259 = pneg %p162
      %p260 = pneg %p191
      %p261 = pneg %p188
      %p262 = scmp.lt.s32.totalorder %s18, 1
      %s263 = scalar_select %p262, %s18, 1
      %s264 = smul.addr %s263, 8
      %s265 = scalar_lea.vmem %s7, %s264
      %p266 = scmp.lt.s32.totalorder %s18, 1
      %s267 = scalar_select %p266, %s18, 1
      %s268 = smul.addr %s267, 8
      %s269 = scalar_lea.vmem %s0, %s268
      %p270 = scmp.lt.s32.totalorder %s18, 1
      %s271 = scalar_select %p270, %s18, 1
      %s272 = smul.addr %s271, 8
      %s273 = scalar_lea.vmem %s7, %s272
      %v274 = vld [vmem:[%s269] sm:$0xff]
      %v275 = vld [vmem:[%s1] sm:$0xff]
      %v276 = vld [vmem:[%s1 + $0x8] sm:$0xff]
      %v277 = vld [vmem:[%s2] sm:$0x1]
      %v279 = vperm.slane %v277, 0
      %vm281 = vcmask 130048
      %v283 = vsel %vm281, %v274, 0
      %285 = vmatpush.msra.mxu0 0.0
      %286 = vmatpush.msra.mxu0 0.0
      %287 = vmatpush.msra.mxu0 0.0
      %288 = vmatpush.msra.mxu0 0.0
      %289 = vmatpush.msra.mxu0 0.0
      %290 = vmatpush.msra.mxu0 0.0
      %291 = vmatpush.msra.mxu0 0.0
      %292 = vmatpush.msra.mxu0 0.0
      %293 = vmatpush.msra.mxu0 0.0
      %294 = vmatpush.msra.mxu0 0.0
      %295 = vmatpush.msra.mxu0 0.0
      %296 = vmatpush.msra.mxu0 0.0
      %297 = vmatpush.msra.mxu0 0.0
      %298 = vmatpush.msra.mxu0 0.0
      %299 = vmatpush.msra.mxu0 %v276
      %300 = vmatpush.msra.mxu0 %v275
      %301 = vmatmul.f32.gmra.mxu0 %v283
      %v302 = vpop.f32.mrf.mxu0
      %v303 = vadd.f32 %v279, %v302
      %304 = vdwg.mxu0
      %v305 = vmax.f32 %v303, 0.0
      %v306 = vld [vmem:[%s3] sm:$0xff]
      %v307 = vld [vmem:[%s3 + $0x8] sm:$0xff]
      %v308 = vld [vmem:[%s3 + $0x10] sm:$0xff]
      %v309 = vld [vmem:[%s3 + $0x18] sm:$0xff]
      %v310 = vld [vmem:[%s3 + $0x20] sm:$0xff]
      %v311 = vld [vmem:[%s3 + $0x28] sm:$0xff]
      %v312 = vld [vmem:[%s3 + $0x30] sm:$0xff]
      %v313 = vld [vmem:[%s3 + $0x38] sm:$0xff]
      %v314 = vld [vmem:[%s4] sm:$0x1]
      %v316 = vperm.slane %v314, 0
      %vm318 = vcmask 523264
      %v320 = vsel %vm318, %v305, 0
      %322 = vmatpush.msra.mxu0 0.0
      %323 = vmatpush.msra.mxu0 0.0
      %324 = vmatpush.msra.mxu0 0.0
      %325 = vmatpush.msra.mxu0 0.0
      %326 = vmatpush.msra.mxu0 0.0
      %327 = vmatpush.msra.mxu0 0.0
      %328 = vmatpush.msra.mxu0 0.0
      %329 = vmatpush.msra.mxu0 0.0
      %330 = vmatpush.msra.mxu0 %v313
      %331 = vmatpush.msra.mxu0 %v312
      %332 = vmatpush.msra.mxu0 %v311
      %333 = vmatpush.msra.mxu0 %v310
      %334 = vmatpush.msra.mxu0 %v309
      %335 = vmatpush.msra.mxu0 %v308
      %336 = vmatpush.msra.mxu0 %v307
      %337 = vmatpush.msra.mxu0 %v306
      %338 = vmatmul.f32.gmra.mxu0 %v320
      %v339 = vpop.f32.mrf.mxu0
      %v340 = vadd.f32 %v316, %v339
      %341 = vdwg.mxu0
      %v342 = vmax.f32 %v340, 0.0
      %v343 = vld [vmem:[%s5] sm:$0xff]
      %v344 = vld [vmem:[%s5 + $0x8] sm:$0xff]
      %v345 = vld [vmem:[%s5 + $0x10] sm:$0xff]
      %v346 = vld [vmem:[%s5 + $0x18] sm:$0xff]
      %v347 = vld [vmem:[%s5 + $0x20] sm:$0xff]
      %v348 = vld [vmem:[%s5 + $0x28] sm:$0xff]
      %v349 = vld [vmem:[%s5 + $0x30] sm:$0xff]
      %v350 = vld [vmem:[%s5 + $0x38] sm:$0xff]
      %v351 = vld [vmem:[%s6] sm:$0x1]
      %v353 = vperm.slane %v351, 0
      %v356 = vsel %vm318, %v342, 0
      %358 = vmatpush.msra.mxu0 0.0
      %359 = vmatpush.msra.mxu0 0.0
      %360 = vmatpush.msra.mxu0 0.0
      %361 = vmatpush.msra.mxu0 0.0
      %362 = vmatpush.msra.mxu0 0.0
      %363 = vmatpush.msra.mxu0 0.0
      %364 = vmatpush.msra.mxu0 0.0
      %365 = vmatpush.msra.mxu0 0.0
      %366 = vmatpush.msra.mxu0 %v350
      %367 = vmatpush.msra.mxu0 %v349
      %368 = vmatpush.msra.mxu0 %v348
      %369 = vmatpush.msra.mxu0 %v347
      %370 = vmatpush.msra.mxu0 %v346
      %371 = vmatpush.msra.mxu0 %v345
      %372 = vmatpush.msra.mxu0 %v344
      %373 = vmatpush.msra.mxu0 %v343
      %374 = vmatmul.f32.gmra.mxu0 %v356
      %v375 = vpop.f32.mrf.mxu0
      %v376 = vadd.f32 %v353, %v375
      %377 = vdwg.mxu0
      %vm378 = vcmask 261120
      %379 = vst.msk [vmem:[%s273] sm:$0xff] %vm378, %v376
      %p380 = scmp.lt.s32.totalorder %s18, 1
      %s381 = scalar_select %p380, %s18, 1
      %s382 = smul.addr %s381, 8
      %s383 = scalar_lea.vmem %s7, %s382
      // Predicated region
      $region49: #{dkf_latent_state_transition_forward.1} parent=47 // pred_check
        %p384 = pneg %p188
      $region50: #{dkf_latent_state_transition_forward.1} parent=47 // pred_check_branch
        %386 = sbr.rel (%p384) target = $region52
      $region51: #{dkf_latent_state_transition_forward.1} parent=47 // pred_region
        _
      $region52: #{dkf_latent_state_transition_forward.1} parent=47 // pred_fallthru
        _
    $region48: #{dkf_latent_state_transition_forward.1} parent=5 // pred_fallthru
      _
    %p387 = scmp.le.s32.totalorder 2, %s13
    // Predicated region
    $region53: #{dkf_latent_state_transition_forward.1} parent=5 // pred_check
      %p388 = pneg %p387
    $region54: #{dkf_latent_state_transition_forward.1} parent=5 // pred_check_branch
      %390 = sbr.rel (%p388) target = $region56
    $region55: #{dkf_latent_state_transition_forward.1} parent=5 // pred_region
      %s391 = ssub.s32 %s13, 2
      // Predicated region
      $region57: #{dkf_latent_state_transition_forward.1} parent=55 // pred_check
        %p392 = pneg %p194
      $region58: #{dkf_latent_state_transition_forward.1} parent=55 // pred_check_branch
        %394 = sbr.rel (%p392) target = $region60
      $region59: #{dkf_latent_state_transition_forward.1} parent=55 // pred_region
        %p395 = scmp.lt.s32.totalorder %s19, 1
        %s396 = scalar_select %p395, %s19, 1
        %s397 = smul.addr %s396, 8
        %s398 = scalar_lea.vmem %s7, %s397
      $region60: #{dkf_latent_state_transition_forward.1} parent=55 // pred_fallthru
        _
    $region56: #{dkf_latent_state_transition_forward.1} parent=5 // pred_fallthru
      _
  $region6: #{dkf_latent_state_transition_forward.1} parent=0 // loop_footer
    %s17 = sadd.s32 1, %s13
  $region7: #{dkf_latent_state_transition_forward.1} parent=0 // loop_footer_branch
    %12 = sbr.rel target = $region3
  $region8: #{dkf_latent_state_transition_forward.1} parent=0 // loop_exit
    _

</llo_original>
